<compile_context>
chip_gen: v7x
topology: tpu7x:2x2x1
jax: 0.10.0
libtpu: 0.0.40
codegen_flags: <defaults>
</compile_context>

<pallas_src>
import math

import jax
import jax.numpy as jnp
from jax.experimental import pallas as pl
from jax.experimental.pallas import tpu as pltpu


def _round_up(x, m):
    return ((x + m - 1) // m) * m


def _cdiv(a, b):
    return (a + b - 1) // b


# ---------------------------------------------------------------------------
# Kernels
# ---------------------------------------------------------------------------

def _proj_kernel(x_ref, w_ref, b_ref, o_ref):
    """One (tm, tv) output tile: logits = x @ W + b (bf16 MXU, f32 acc)."""
    logits = jnp.dot(x_ref[...], w_ref[...], preferred_element_type=jnp.float32)
    o_ref[...] = (logits + b_ref[...]).astype(o_ref.dtype)


def _proj_kernel_ksplit(x_ref, w_ref, b_ref, o_ref, acc_ref):
    """K-split variant for very large D: accumulate D tiles in f32 VMEM."""
    k = pl.program_id(2)

    @pl.when(k == 0)
    def _():
        acc_ref[...] = jnp.zeros_like(acc_ref)

    acc_ref[...] += jnp.dot(x_ref[...], w_ref[...],
                            preferred_element_type=jnp.float32)

    @pl.when(k == pl.num_programs(2) - 1)
    def _():
        o_ref[...] = (acc_ref[...] + b_ref[...]).astype(o_ref.dtype)


# ---------------------------------------------------------------------------
# Generation-aware tiling helpers
# ---------------------------------------------------------------------------

def _vmem_budget_bytes():
    """Usable VMEM budget for pipeline buffers, per TPU generation."""
    cap = 64 * 1024 * 1024  # conservative default (v7x per-TC VMEM)
    try:
        info = pltpu.get_tpu_info()
        c = getattr(info, "vmem_capacity_bytes", None)
        if c:
            cap = int(c)
    except Exception:
        pass
    if cap >= 128 * 1024 * 1024:       # v5e / v6e
        return 96 * 1024 * 1024
    return 44 * 1024 * 1024            # v7x: leave ~20 MiB compiler headroom


def _footprint_2d(tm, d, tv, out_bytes, w_bufs):
    return (tm * d * 2 * 2                 # x bf16, double-buffered
            + d * tv * 2 * w_bufs          # W bf16, w_bufs-deep
            + tv * 4 * 2                   # bias f32, double-buffered
            + tm * tv * out_bytes * 2)     # output tile, double-buffered


def _footprint_ksplit(tm, tk, tv, out_bytes):
    return (tm * tk * 2 * 2
            + tk * tv * 2 * 2
            + tv * 4 * 2
            + tm * tv * out_bytes * 2
            + tm * tv * 4)                 # f32 accumulator scratch


# ---------------------------------------------------------------------------
# Forward wrapper
# ---------------------------------------------------------------------------

def transformer_forward(src_tokens, src_mask, params, *, tm=256,
                        out_dtype=jnp.float32):
    """BERT-style Transformer forward (empty encoder => identity).

    src_tokens: int32 [B, S]; src_mask is unused (encoder has no layers).
    Returns logits [B, S, vocab] in `out_dtype` (use jnp.bfloat16 to halve the
    dominant M*V output write if the downstream consumer tolerates it).
    """
    del src_mask  # encoder is an empty ModuleList in the reference => identity
    emb_table = params["embedding"]          # [V, D] f32
    pe = params["pe"]                        # [max_seq, D] f32
    w_proj = params["w_proj"]                # [D, V] f32
    b_proj = params["b_proj"]                # [V] f32

    B, S = src_tokens.shape
    V, D = emb_table.shape
    if S > pe.shape[0]:
        raise ValueError(f"sequence length {S} exceeds max_seq_len {pe.shape[0]}")
    M = B * S
    scale = float(math.sqrt(D))
    out_bytes = jnp.dtype(out_dtype).itemsize

    # Glue (fused by XLA when this wrapper is jitted): gather, scale, +PE and
    # bf16 cast produce ONE [M, D] bf16 activation that hits HBM.
    x = (jnp.take(emb_table, src_tokens.reshape(M), axis=0) * scale
         + jnp.broadcast_to(pe[None, :S, :], (B, S, D)).reshape(M, D)
         ).astype(jnp.bfloat16)
    w_bf16 = w_proj.astype(jnp.bfloat16)

    budget = _vmem_budget_bytes()

    # Waste-aware M tiling (16-row alignment for bf16 sublane packing).
    n_m = max(1, _cdiv(M, tm))
    tm_eff = _round_up(_cdiv(M, n_m), 16)
    Mp = n_m * tm_eff
    if Mp != M:
        x = jnp.pad(x, ((0, Mp - M), (0, 0)))

    # Largest tv whose pipelined footprint fits the generation's budget.
    tv_target = None
    for cand in (4096, 2048, 1024, 512, 256, 128):
        bufs = 3 if _cdiv(V, cand) >= 2 else 2
        if _footprint_2d(tm_eff, D, cand, out_bytes, bufs) <= budget:
            tv_target = cand
            break

    if tv_target is not None:
        # ------------------------------------------------------------------
        # Main path: full D resident, V-outermost grid, W streamed once.
        # ------------------------------------------------------------------
        n_v = _cdiv(V, tv_target)
        tv_eff = _round_up(_cdiv(V, n_v), 128)
        Vp = n_v * tv_eff
        if Vp != V:
            w_bf16 = jnp.pad(w_bf16, ((0, 0), (0, Vp - V)))
            b2d = jnp.pad(b_proj, (0, Vp - V)).reshape(1, Vp)
        else:
            b2d = b_proj.reshape(1, Vp)

        w_bufs = 3 if n_v >= 2 else 2
        if w_bufs == 3:
            # Deeper buffering hides the W-tile DMA bubble at V boundaries.
            w_spec = pl.BlockSpec((D, tv_eff), lambda v, m: (0, v),
                                  pipeline_mode=pl.Buffered(3))
        else:
            w_spec = pl.BlockSpec((D, tv_eff), lambda v, m: (0, v))

        footprint = _footprint_2d(tm_eff, D, tv_eff, out_bytes, w_bufs)
        vmem_limit = min(budget,
                         max(32 * 1024 * 1024, footprint + 8 * 1024 * 1024))

        out = pl.pallas_call(
            _proj_kernel,
            out_shape=jax.ShapeDtypeStruct((Mp, Vp), out_dtype),
            grid_spec=pltpu.PrefetchScalarGridSpec(
                num_scalar_prefetch=0,
                grid=(n_v, n_m),   # V outermost: each W tile DMA'd once total
                in_specs=[
                    pl.BlockSpec((tm_eff, D), lambda v, m: (m, 0)),   # x rows
                    w_spec,                                           # W cols
                    pl.BlockSpec((1, tv_eff), lambda v, m: (0, v)),   # bias
                ],
                out_specs=pl.BlockSpec((tm_eff, tv_eff), lambda v, m: (m, v)),
            ),
            compiler_params=pltpu.CompilerParams(
                dimension_semantics=("parallel", "parallel"),
                vmem_limit_bytes=vmem_limit,
            ),
        )(x, w_bf16, b2d)
    else:
        # ------------------------------------------------------------------
        # K-split path for very large D (mainly v7x, 64 MiB VMEM per TC):
        # f32 VMEM accumulator over D tiles.
        # ------------------------------------------------------------------
        tv_eff = tk_eff = None
        for tv_c in (2048, 1024, 512, 256, 128):
            for tk_c in (2048, 1024, 512, 256, 128):
                if _footprint_ksplit(tm_eff, tk_c, tv_c, out_bytes) <= budget:
                    tv_eff, tk_eff = tv_c, tk_c
                    break
            if tv_eff is not None:
                break
        if tv_eff is None:
            tv_eff, tk_eff = 128, 128  # last resort

        n_v = _cdiv(V, tv_eff)
        Vp = n_v * tv_eff
        n_k = _cdiv(D, tk_eff)
        Dp = n_k * tk_eff

        if Dp != D:
            x = jnp.pad(x, ((0, 0), (0, Dp - D)))
            w_bf16 = jnp.pad(w_bf16, ((0, Dp - D), (0, 0)))
        if Vp != V:
            w_bf16 = jnp.pad(w_bf16, ((0, 0), (0, Vp - V)))
            b2d = jnp.pad(b_proj, (0, Vp - V)).reshape(1, Vp)
        else:
            b2d = b_proj.reshape(1, Vp)

        footprint = _footprint_ksplit(tm_eff, tk_eff, tv_eff, out_bytes)
        vmem_limit = min(budget,
                         max(32 * 1024 * 1024, footprint + 8 * 1024 * 1024))

        out = pl.pallas_call(
            _proj_kernel_ksplit,
            out_shape=jax.ShapeDtypeStruct((Mp, Vp), out_dtype),
            grid_spec=pltpu.PrefetchScalarGridSpec(
                num_scalar_prefetch=0,
                grid=(n_v, n_m, n_k),   # reduction axis innermost
                in_specs=[
                    pl.BlockSpec((tm_eff, tk_eff), lambda v, m, k: (m, k)),
                    pl.BlockSpec((tk_eff, tv_eff), lambda v, m, k: (k, v)),
                    pl.BlockSpec((1, tv_eff), lambda v, m, k: (0, v)),
                ],
                out_specs=pl.BlockSpec((tm_eff, tv_eff),
                                       lambda v, m, k: (m, v)),
                scratch_shapes=[pltpu.VMEM((tm_eff, tv_eff), jnp.float32)],
            ),
            compiler_params=pltpu.CompilerParams(
                dimension_semantics=("parallel", "parallel", "arbitrary"),
                vmem_limit_bytes=vmem_limit,
            ),
        )(x, w_bf16, b2d)

    # Drop padding and restore [B, S, V].
    return out[:M, :V].reshape(B, S, V)


# ---------------------------------------------------------------------------
# Parameter construction (matches the torch reference initializers)
# ---------------------------------------------------------------------------

def make_params(key, d_model, vocab_size, max_seq_len):
    k_emb, k_w, k_b = jax.random.split(key, 3)
    # nn.Embedding default init: N(0, 1)
    embedding = jax.random.normal(k_emb, (vocab_size, d_model), dtype=jnp.float32)
    # nn.Linear default init: U(-1/sqrt(fan_in), 1/sqrt(fan_in))
    bound = 1.0 / math.sqrt(d_model)
    w_proj = jax.random.uniform(k_w, (d_model, vocab_size),
                                minval=-bound, maxval=bound, dtype=jnp.float32)
    b_proj = jax.random.uniform(k_b, (vocab_size,),
                                minval=-bound, maxval=bound, dtype=jnp.float32)
    # Sinusoidal positional encoding, identical to the torch reference.
    position = jnp.arange(max_seq_len, dtype=jnp.float32)[:, None]            # [L, 1]
    div_term = jnp.exp(jnp.arange(0, d_model, 2, dtype=jnp.float32)
                       * -(math.log(10000.0) / d_model))                      # [D/2]
    pe = jnp.zeros((max_seq_len, d_model), dtype=jnp.float32)
    pe = pe.at[:, 0::2].set(jnp.sin(position * div_term))
    pe = pe.at[:, 1::2].set(jnp.cos(position * div_term))
    return {"embedding": embedding, "pe": pe, "w_proj": w_proj, "b_proj": b_proj}


if __name__ == "__main__":
    B, S, D, V, MAX_SEQ = 2, 8, 32, 64, 16

    key = jax.random.PRNGKey(0)
    k_params, k_tok = jax.random.split(key)
    params = make_params(k_params, d_model=D, vocab_size=V, max_seq_len=MAX_SEQ)

    src = jax.random.randint(k_tok, (B, S), 0, V, dtype=jnp.int32)
    src_mask = jnp.ones((B, 1, 1, S), dtype=jnp.float32)  # unused: empty encoder

    # Jit the whole forward so gather + scale + PE + bf16 cast fuse in XLA.
    fwd = jax.jit(lambda s: transformer_forward(s, src_mask, params))
    logits = fwd(src)
    jax.block_until_ready(logits)
    assert logits.shape == (B, S, V)
    assert logits.dtype == jnp.float32

    # Pure-JAX reference with the same bf16-rounded matmul operands
    # (kernel streams bf16 activations/weights into an f32 MXU accumulator).
    emb = jnp.take(params["embedding"], src, axis=0) * math.sqrt(D)
    x_ref = emb + params["pe"][None, :S, :]
    x_bf = x_ref.astype(jnp.bfloat16).astype(jnp.float32)
    w_bf = params["w_proj"].astype(jnp.bfloat16).astype(jnp.float32)
    ref = jnp.einsum("bsd,dv->bsv", x_bf, w_bf,
                     precision=jax.lax.Precision.HIGHEST) + params["b_proj"]
    assert jnp.allclose(logits, ref, atol=1e-3, rtol=1e-3)

    print("KERNEL_OK")
</pallas_src>

<mosaic_0001>
module attributes {stable_mosaic.version = 11 : i64} {
  func.func @_proj_kernel(%arg0: i32, %arg1: i32, %arg2: memref<16x32xbf16, #tpu.memory_space<vmem>>, %arg3: memref<32x128xbf16, #tpu.memory_space<vmem>>, %arg4: memref<1x128xf32, #tpu.memory_space<vmem>>, %arg5: memref<16x128xf32, #tpu.memory_space<vmem>>) attributes {dimension_semantics = [#tpu.dimension_semantics<parallel>, #tpu.dimension_semantics<parallel>], iteration_bounds = array<i64: 1, 1>, scalar_prefetch = 0 : i64, scratch_operands = 0 : i64, tpu.core_type = #tpu.core_type<tc>, window_params = [{transform_indices = @transform_0, window_bounds = array<i64: 16, 32>}, {transform_indices = @transform_1, window_bounds = array<i64: 32, 128>}, {transform_indices = @transform_2, window_bounds = array<i64: 1, 128>}, {transform_indices = @transform_3, window_bounds = array<i64: 16, 128>}]} {
    %c0 = arith.constant 0 : index
    %c0_0 = arith.constant 0 : index
    %0 = vector.load %arg2[%c0, %c0_0] : memref<16x32xbf16, #tpu.memory_space<vmem>>, vector<16x32xbf16>
    %c0_1 = arith.constant 0 : index
    %c0_2 = arith.constant 0 : index
    %1 = vector.load %arg3[%c0_1, %c0_2] : memref<32x128xbf16, #tpu.memory_space<vmem>>, vector<32x128xbf16>
    %cst = arith.constant dense<0.000000e+00> : vector<16x128xf32>
    %2 = tpu.matmul %0, %1, %cst {dimension_numbers = #tpu.dot_dimension_numbers<[1], [0], [0], [1], [0, 0, 1, 1], [], []>} : vector<16x32xbf16>, vector<32x128xbf16>, vector<16x128xf32> -> vector<16x128xf32>
    %c0_3 = arith.constant 0 : index
    %c0_4 = arith.constant 0 : index
    %3 = vector.load %arg4[%c0_3, %c0_4] : memref<1x128xf32, #tpu.memory_space<vmem>>, vector<1x128xf32>
    %4 = vector.broadcast %3 : vector<1x128xf32> to vector<16x128xf32>
    %5 = arith.addf %2, %4 : vector<16x128xf32>
    %c0_5 = arith.constant 0 : index
    %c0_6 = arith.constant 0 : index
    %6 = vector.load %arg5[%c0_5, %c0_6] : memref<16x128xf32, #tpu.memory_space<vmem>>, vector<16x128xf32>
    tpu.vector_store %arg5[%c0_5, %c0_6], %5 {strides = array<i32>} : memref<16x128xf32, #tpu.memory_space<vmem>>, vector<16x128xf32>,
    return
  }
  func.func @transform_0(%arg0: i32, %arg1: i32) -> (i32, i32) {
    %c0_i32 = arith.constant 0 : i32
    %c0_i32_0 = arith.constant 0 : i32
    return %arg1, %c0_i32 : i32, i32
  }
  func.func @transform_1(%arg0: i32, %arg1: i32) -> (i32, i32) {
    %c0_i32 = arith.constant 0 : i32
    %c0_i32_0 = arith.constant 0 : i32
    return %c0_i32, %arg0 : i32, i32
  }
  func.func @transform_2(%arg0: i32, %arg1: i32) -> (i32, i32) {
    %c0_i32 = arith.constant 0 : i32
    %c0_i32_0 = arith.constant 0 : i32
    return %c0_i32, %arg0 : i32, i32
  }
  func.func @transform_3(%arg0: i32, %arg1: i32) -> (i32, i32) {
    %c0_i32 = arith.constant 0 : i32
    return %arg1, %arg0 : i32, i32
  }
}

</mosaic_0001>

<llo_original>
// kernel: _lambda_.1
$region0: #{_lambda_.1}
  #allocation0 [shape = 'u32[]', space=smem, size = 0x4, offset = 0x4, fixed_abs, tag = 'smem constant byte address 0x4 - core index']
  #allocation1 [shape = 'u32[144,128]{1,0:T(1,128)}', space=vmem, size = 0x12000, scoped, tag = 'internal scratch']
  %s0 = inlined_call_operand.vmem [shape: bf16[16,32], index: 0, kind: input, shape index: {}]
  %s1 = inlined_call_operand.vmem [shape: bf16[32,128], index: 1, kind: input, shape index: {}]
  %s2 = inlined_call_operand.vmem [shape: f32[1,128], index: 2, kind: input, shape index: {}]
  %s3 = inlined_call_operand.vmem [shape: f32[16,128], index: 3, kind: output, shape index: {}]
  %s4 = sld [smem:[#allocation0]]
  $region22: #{_lambda_.1} parent=0
    _
  %s6 = ssub.s32 1, %s4
  %s7 = scalar_select 0, %s6, %s4
  // Predicated region
  $region2: #{_lambda_.1} parent=0 // pred_check
    _
  $region3: #{_lambda_.1} parent=0 // pred_check_branch
    %9 = sbr.rel (0) target = $region5
  $region4: #{_lambda_.1} parent=0 // pred_region
    _
  $region5: #{_lambda_.1} parent=0 // pred_fallthru
    _
  // Predicated region
  $region6: #{_lambda_.1} parent=0 // pred_check
    _
  $region7: #{_lambda_.1} parent=0 // pred_check_branch
    %11 = sbr.rel (0) target = $region9
  $region8: #{_lambda_.1} parent=0 // pred_region
    _
  $region9: #{_lambda_.1} parent=0 // pred_fallthru
    _
  // Predicated region
  $region10: #{_lambda_.1} parent=0 // pred_check
    _
  $region11: #{_lambda_.1} parent=0 // pred_check_branch
    %13 = sbr.rel (0) target = $region13
  $region12: #{_lambda_.1} parent=0 // pred_region
    _
  $region13: #{_lambda_.1} parent=0 // pred_fallthru
    _
  %v15 = vld [vmem:[%s0] sm:$0xf]
  %v16 = vld [vmem:[%s0 + $0x4] sm:$0xf]
  %v17 = vld [vmem:[%s1] sm:$0xf]
  %v18 = vld [vmem:[%s1 + $0x4] sm:$0xf]
  %v19 = vld [vmem:[%s1 + $0x8] sm:$0xf]
  %v20 = vld [vmem:[%s1 + $0xc] sm:$0xf]
  %v21 = vld [vmem:[%s2] sm:$0x1]
  %v23 = vlaneseq
  %v24 = vshrl.u32 %v23, 7
  %v25 = vsub.s32 0, %v24
  %v26 = vrot.slane %v21, %v25
  %v30 = vunpack.c.l.b16 %v15
  %v31 = vunpack.c.l.b16 %v16
  %v32 = vpack.c.b16 %v31, %v30
  %v37 = vunpack.c.l.b16 %v17
  %v38 = vunpack.c.l.b16 %v18
  %v39 = vunpack.c.l.b16 %v19
  %v40 = vunpack.c.l.b16 %v20
  %v41 = vpack.c.b16 %v38, %v37
  %v42 = vpack.c.b16 %v40, %v39
  %vm45 = vcmask 261120
  %v47 = vsel %vm45, %v32, 0
  %49 = vmatprep.subr.bf16.mxu0 0
  %50 = vmatpush1.bf16.msra.mxu0 %v41
  %51 = vmatprep.subr.bf16.mxu0 0
  %52 = vmatpush1.bf16.msra.mxu0 %v42
  %53 = vmatprep.subr.bf16.mxu0 0
  %54 = vmatpush1.bf16.msra.mxu0 0
  %55 = vmatprep.subr.bf16.mxu0 0
  %56 = vmatpush1.bf16.msra.mxu0 0
  %57 = vmatprep.subr.bf16.mxu0 0
  %58 = vmatpush1.bf16.msra.mxu0 0
  %59 = vmatprep.subr.bf16.mxu0 0
  %60 = vmatpush1.bf16.msra.mxu0 0
  %61 = vmatprep.subr.bf16.mxu0 0
  %62 = vmatpush1.bf16.msra.mxu0 0
  %63 = vmatprep.subr.bf16.mxu0 0
  %64 = vmatpush1.bf16.msra.mxu0 0
  %65 = vmatprep.subr.bf16.mxu0 0
  %66 = vmatpush1.bf16.msra.mxu0 0
  %67 = vmatprep.subr.bf16.mxu0 0
  %68 = vmatpush1.bf16.msra.mxu0 0
  %69 = vmatprep.subr.bf16.mxu0 0
  %70 = vmatpush1.bf16.msra.mxu0 0
  %71 = vmatprep.subr.bf16.mxu0 0
  %72 = vmatpush1.bf16.msra.mxu0 0
  %73 = vmatprep.subr.bf16.mxu0 0
  %74 = vmatpush1.bf16.msra.mxu0 0
  %75 = vmatprep.subr.bf16.mxu0 0
  %76 = vmatpush1.bf16.msra.mxu0 0
  %77 = vmatprep.subr.bf16.mxu0 0
  %78 = vmatpush1.bf16.msra.mxu0 0
  %79 = vmatprep.subr.bf16.mxu0 0
  %80 = vmatpush1.bf16.msra.mxu0 0
  %81 = vmatprep.mubr.bf16.mxu0 0
  %82 = vmatmul.mubr.bf16.gmra.mrb[0].mxu0 %v47
  %v83 = vpop.f32.mrb[0].mxu0
  %v84 = vadd.f32 %v26, %v83
  %v85 = vpop.f32.mrb[0].mxu0
  %v86 = vpop.f32.mrb[0].mxu0
  %v87 = vadd.f32 %v26, %v86
  %v88 = vpop.f32.mrb[0].mxu0
  %89 = vdwg.mxu0
  %90 = vst [vmem:[%s3] sm:$0xff] %v84
  %91 = vst [vmem:[%s3 + $0x8] sm:$0xff] %v87
  // Predicated region
  $region14: #{_lambda_.1} parent=0 // pred_check
    _
  $region15: #{_lambda_.1} parent=0 // pred_check_branch
    %93 = sbr.rel (0) target = $region17
  $region16: #{_lambda_.1} parent=0 // pred_region
    _
  $region17: #{_lambda_.1} parent=0 // pred_fallthru
    _
  // Predicated region
  $region18: #{_lambda_.1} parent=0 // pred_check
    _
  $region19: #{_lambda_.1} parent=0 // pred_check_branch
    %95 = sbr.rel (0) target = $region21
  $region20: #{_lambda_.1} parent=0 // pred_region
    _
  $region21: #{_lambda_.1} parent=0 // pred_fallthru
    _

</llo_original>
